<compile_context>
chip_gen: v5e
topology: v5e:2x2
jax: 0.10.0
libtpu: 0.0.40
codegen_flags: <defaults>
</compile_context>

<pallas_src>
import jax
import jax.numpy as jnp
from jax.experimental import pallas as pl
from jax.experimental.pallas import tpu as pltpu

# Config mirroring the module.  res_step=3, res_start=5 => the residual loop
# only runs if int(num_hidden_layers/3) > 5, so we use a 24-layer config
# (with BERT-base's 12 layers the original forward would crash on
# classifier(None)).  Loop indices that execute: i = 5, 6, 7.
NUM_HIDDEN_LAYERS = 24
RES_STEP = 3
RES_START = 5

B = 2     # batch
S = 16    # sequence length
H = 32    # hidden size
M = 2     # mask_length (masked positions per example)
C = 3     # nums_label
V = 64    # vocab size (mlm decoder output)


def _gelu_tanh(x):
    # TODO(synk): BERT's cls-transform uses exact erf-GELU; the tanh
    # approximation is used here for a guaranteed Mosaic lowering.
    c = 0.7978845608028654  # sqrt(2/pi)
    return 0.5 * x * (1.0 + jnp.tanh(c * (x + 0.044715 * x * x * x)))


def _kernel(mpos_ref,          # SMEM [B*M] int32 masked positions (row-major b, m)
            hs_ref,            # VMEM [4*B, S, H]: layers (15,18,21,24) x batch
            wstack_ref,        # VMEM [4, H, H]: w5, w6, w7, wt
            bstack_ref,        # VMEM [6, H]:    b5, b6, b7, bt, ln_g, ln_b
            wc_ref,            # VMEM [H, C]     classifier weight
            wd_ref,            # VMEM [H, V]     mlm decoder weight
            bcd_ref,           # VMEM [1, C+V]   classifier bias | decoder bias
            cls_ref,           # out  [2B, C]    rows 0..B-1 logits, B..2B-1 probs
            mlm_ref):          # out  [B*M, V]
    bias_all = bstack_ref[...]                         # [6, H]
    bcd = bcd_ref[...]                                 # [1, C+V]

    # masked positions as scalars from SMEM
    pos = [mpos_ref[i] for i in range(B * M)]

    def row(layer, b, p):
        # one token's hidden vector of a given layer: dynamic sublane slice -> [1, H]
        return hs_ref[layer * B + b, pl.ds(p, 1), :]

    def gather_first(layer):
        # hidden vectors at the FIRST masked position, whole batch -> [B, H]
        return jnp.concatenate([row(layer, b, pos[b * M]) for b in range(B)],
                               axis=0)

    # ---- reslayer chain: hs[15] -> (+hs[18]) -> (+hs[21]) -> (+hs[24]) ------
    x = gather_first(0)                                # hs[15] @ pos0, [B, H]
    for i in range(3):                                 # reslayer[5], [6], [7]
        x = jnp.maximum(
            jnp.dot(x, wstack_ref[i], preferred_element_type=jnp.float32)
            + bias_all[i:i + 1, :], 0.0)
        x = x + gather_first(i + 1)                    # hs[18]/hs[21]/hs[24]

    # ---- classifier (Dropout == identity at inference) + softmax ------------
    logits = (jnp.dot(x, wc_ref[...], preferred_element_type=jnp.float32)
              + bcd[:, :C])                            # [B, C]
    mx = jnp.max(logits, axis=-1, keepdims=True)
    ex = jnp.exp(logits - mx)
    probs = ex / jnp.sum(ex, axis=-1, keepdims=True)
    cls_ref[...] = jnp.concatenate([logits, probs], axis=0)   # single store

    # ---- MLM head (mlm.cls) at every masked position of the last layer ------
    # all B*M rows batched into one tile -> one transform / one decoder matmul
    xm = jnp.concatenate(
        [row(3, b, pos[b * M + m]) for b in range(B) for m in range(M)],
        axis=0)                                        # [B*M, H]
    t = (jnp.dot(xm, wstack_ref[3], preferred_element_type=jnp.float32)
         + bias_all[3:4, :])
    t = _gelu_tanh(t)
    mu = jnp.mean(t, axis=-1, keepdims=True)
    var = jnp.mean((t - mu) * (t - mu), axis=-1, keepdims=True)
    t = (t - mu) * jax.lax.rsqrt(var + 1e-12)
    t = t * bias_all[4:5, :] + bias_all[5:6, :]
    mlm_ref[...] = (jnp.dot(t, wd_ref[...], preferred_element_type=jnp.float32)
                    + bcd[:, C:])                      # [B*M, V], single store


def prompt_forward(masked_positions, h15, h18, h21, h24, params):
    # Pack the many tiny tensors into a handful of slabs (one DMA each).
    hs_all = jnp.concatenate([h15, h18, h21, h24], axis=0)          # [4B, S, H]
    w_stack = jnp.stack([params["w5"], params["w6"], params["w7"],
                         params["wt"]], axis=0)                     # [4, H, H]
    b_stack = jnp.concatenate([params["b5"], params["b6"], params["b7"],
                               params["bt"], params["ln_g"],
                               params["ln_b"]], axis=0)             # [6, H]
    bcd = jnp.concatenate([params["bc"], params["bd"]], axis=1)     # [1, C+V]
    mpos = masked_positions.reshape(-1).astype(jnp.int32)           # [B*M]

    vmem = pl.BlockSpec(memory_space=pltpu.MemorySpace.VMEM)
    smem = pl.BlockSpec(memory_space=pltpu.MemorySpace.SMEM)

    cls_out, mlm_out = pl.pallas_call(
        _kernel,
        out_shape=(jax.ShapeDtypeStruct((2 * B, C), jnp.float32),
                   jax.ShapeDtypeStruct((B * M, V), jnp.float32)),
        in_specs=[smem, vmem, vmem, vmem, vmem, vmem, vmem],
        out_specs=(vmem, vmem),
    )(mpos, hs_all, w_stack, b_stack, params["wc"], params["wd"], bcd)

    logits = cls_out[:B]
    probs = cls_out[B:]
    mlm = mlm_out.reshape(B, M, V)
    return logits, probs, mlm


def reference_forward(masked_positions, hs, params):
    """Pure-JAX reference of the same forward (for a correctness check)."""
    pos0 = masked_positions[:, 0]
    bidx = jnp.arange(B)

    def gather_first(h):
        return h[bidx, pos0]                               # [B, H]

    x = gather_first(hs[15])
    for kw, kb, li in (("w5", "b5", 18), ("w6", "b6", 21), ("w7", "b7", 24)):
        x = jnp.maximum(x @ params[kw] + params[kb][0], 0.0)
        x = x + gather_first(hs[li])
    logits = x @ params["wc"] + params["bc"][0]
    probs = jax.nn.softmax(logits, axis=-1)

    xm = hs[24][bidx[:, None], masked_positions]           # [B, M, H]
    t = xm @ params["wt"] + params["bt"][0]
    t = _gelu_tanh(t)
    mu = t.mean(-1, keepdims=True)
    var = ((t - mu) ** 2).mean(-1, keepdims=True)
    t = (t - mu) * jax.lax.rsqrt(var + 1e-12)
    t = t * params["ln_g"][0] + params["ln_b"][0]
    mlm = t @ params["wd"] + params["bd"][0]
    return logits, probs, mlm


if __name__ == "__main__":
    key = jax.random.PRNGKey(0)
    ks = jax.random.split(key, 24)

    # Synthetic frozen-BERT per-layer hidden states (only the used layers).
    h15 = jax.random.normal(ks[0], (B, S, H), jnp.float32)
    h18 = jax.random.normal(ks[1], (B, S, H), jnp.float32)
    h21 = jax.random.normal(ks[2], (B, S, H), jnp.float32)
    h24 = jax.random.normal(ks[3], (B, S, H), jnp.float32)
    masked_positions = jax.random.randint(ks[4], (B, M), 0, S, dtype=jnp.int32)

    sc = 0.05
    params = {
        # reslayer[5..7]: Linear(H, H) + ReLU  (reslayer[0..4] exist but unused)
        "w5": sc * jax.random.normal(ks[5], (H, H), jnp.float32),
        "b5": sc * jax.random.normal(ks[6], (1, H), jnp.float32),
        "w6": sc * jax.random.normal(ks[7], (H, H), jnp.float32),
        "b6": sc * jax.random.normal(ks[8], (1, H), jnp.float32),
        "w7": sc * jax.random.normal(ks[9], (H, H), jnp.float32),
        "b7": sc * jax.random.normal(ks[10], (1, H), jnp.float32),
        # classifier: Dropout + Linear(H, nums_label)
        "wc": sc * jax.random.normal(ks[11], (H, C), jnp.float32),
        "bc": sc * jax.random.normal(ks[12], (1, C), jnp.float32),
        # mlm.cls: transform.dense(H,H) + GELU + LayerNorm(H) + decoder(H,V)
        "wt": sc * jax.random.normal(ks[13], (H, H), jnp.float32),
        "bt": sc * jax.random.normal(ks[14], (1, H), jnp.float32),
        "ln_g": jnp.ones((1, H), jnp.float32),
        "ln_b": jnp.zeros((1, H), jnp.float32),
        "wd": sc * jax.random.normal(ks[15], (H, V), jnp.float32),
        "bd": sc * jax.random.normal(ks[16], (1, V), jnp.float32),
    }

    logits, probs, mlm = prompt_forward(masked_positions, h15, h18, h21, h24, params)
    jax.block_until_ready((logits, probs, mlm))

    r_logits, r_probs, r_mlm = reference_forward(
        masked_positions, {15: h15, 18: h18, 21: h21, 24: h24}, params)
    assert logits.shape == (B, C) and probs.shape == (B, C) and mlm.shape == (B, M, V)
    assert jnp.allclose(logits, r_logits, atol=2e-3, rtol=2e-3)
    assert jnp.allclose(probs, r_probs, atol=2e-3, rtol=2e-3)
    assert jnp.allclose(mlm, r_mlm, atol=2e-3, rtol=2e-3)

    print("KERNEL_OK")
</pallas_src>

<mosaic_0001>
module attributes {stable_mosaic.version = 11 : i64} {
  func.func @_kernel(%arg0: memref<4xi32, #tpu.memory_space<smem>>, %arg1: memref<8x16x32xf32, #tpu.memory_space<vmem>>, %arg2: memref<4x32x32xf32, #tpu.memory_space<vmem>>, %arg3: memref<6x32xf32, #tpu.memory_space<vmem>>, %arg4: memref<32x3xf32, #tpu.memory_space<vmem>>, %arg5: memref<32x64xf32, #tpu.memory_space<vmem>>, %arg6: memref<1x67xf32, #tpu.memory_space<vmem>>, %arg7: memref<4x3xf32, #tpu.memory_space<vmem>>, %arg8: memref<4x64xf32, #tpu.memory_space<vmem>>) attributes {dimension_semantics = [], scalar_prefetch = 0 : i64, scratch_operands = 0 : i64, tpu.core_type = #tpu.core_type<tc>} {
    %c0 = arith.constant 0 : index
    %c0_0 = arith.constant 0 : index
    %0 = vector.load %arg3[%c0, %c0_0] : memref<6x32xf32, #tpu.memory_space<vmem>>, vector<6x32xf32>
    %c0_1 = arith.constant 0 : index
    %c0_2 = arith.constant 0 : index
    %1 = vector.load %arg6[%c0_1, %c0_2] : memref<1x67xf32, #tpu.memory_space<vmem>>, vector<1x67xf32>
    %c0_3 = arith.constant 0 : index
    %2 = memref.load %arg0[%c0_3] : memref<4xi32, #tpu.memory_space<smem>>
    %c1 = arith.constant 1 : index
    %3 = memref.load %arg0[%c1] : memref<4xi32, #tpu.memory_space<smem>>
    %c2 = arith.constant 2 : index
    %4 = memref.load %arg0[%c2] : memref<4xi32, #tpu.memory_space<smem>>
    %c3 = arith.constant 3 : index
    %5 = memref.load %arg0[%c3] : memref<4xi32, #tpu.memory_space<smem>>
    %c0_4 = arith.constant 0 : index
    %6 = arith.index_cast %2 : i32 to index
    %c0_5 = arith.constant 0 : index
    %7 = vector.load %arg1[%c0_4, %6, %c0_5] : memref<8x16x32xf32, #tpu.memory_space<vmem>>, vector<1x1x32xf32>
    %8 = vector.shape_cast %7 : vector<1x1x32xf32> to vector<1x32xf32>
    %c1_6 = arith.constant 1 : index
    %9 = arith.index_cast %4 : i32 to index
    %c0_7 = arith.constant 0 : index
    %10 = vector.load %arg1[%c1_6, %9, %c0_7] : memref<8x16x32xf32, #tpu.memory_space<vmem>>, vector<1x1x32xf32>
    %11 = vector.shape_cast %10 : vector<1x1x32xf32> to vector<1x32xf32>
    %12 = tpu.concatenate %8, %11 in 0 : vector<1x32xf32>, vector<1x32xf32> -> vector<2x32xf32>
    %c0_8 = arith.constant 0 : index
    %c0_9 = arith.constant 0 : index
    %c0_10 = arith.constant 0 : index
    %13 = vector.load %arg2[%c0_8, %c0_9, %c0_10] : memref<4x32x32xf32, #tpu.memory_space<vmem>>, vector<1x32x32xf32>
    %14 = vector.shape_cast %13 : vector<1x32x32xf32> to vector<32x32xf32>
    %cst = arith.constant dense<0.000000e+00> : vector<2x32xf32>
    %15 = tpu.matmul %12, %14, %cst {dimension_numbers = #tpu.dot_dimension_numbers<[1], [0], [0], [1], [0, 0, 1, 1], [], []>} : vector<2x32xf32>, vector<32x32xf32>, vector<2x32xf32> -> vector<2x32xf32>
    %16 = vector.extract_strided_slice %0 {offsets = [0, 0], sizes = [1, 32], strides = [1, 1]} : vector<6x32xf32> to vector<1x32xf32>
    %17 = vector.broadcast %16 : vector<1x32xf32> to vector<2x32xf32>
    %18 = arith.addf %15, %17 : vector<2x32xf32>
    %cst_11 = arith.constant 0.000000e+00 : f32
    %19 = vector.broadcast %cst_11 : f32 to vector<2x32xf32>
    %20 = arith.maximumf %18, %19 : vector<2x32xf32>
    %c2_12 = arith.constant 2 : index
    %21 = arith.index_cast %2 : i32 to index
    %c0_13 = arith.constant 0 : index
    %22 = vector.load %arg1[%c2_12, %21, %c0_13] : memref<8x16x32xf32, #tpu.memory_space<vmem>>, vector<1x1x32xf32>
    %23 = vector.shape_cast %22 : vector<1x1x32xf32> to vector<1x32xf32>
    %c3_14 = arith.constant 3 : index
    %24 = arith.index_cast %4 : i32 to index
    %c0_15 = arith.constant 0 : index
    %25 = vector.load %arg1[%c3_14, %24, %c0_15] : memref<8x16x32xf32, #tpu.memory_space<vmem>>, vector<1x1x32xf32>
    %26 = vector.shape_cast %25 : vector<1x1x32xf32> to vector<1x32xf32>
    %27 = tpu.concatenate %23, %26 in 0 : vector<1x32xf32>, vector<1x32xf32> -> vector<2x32xf32>
    %28 = arith.addf %20, %27 : vector<2x32xf32>
    %c1_16 = arith.constant 1 : index
    %c0_17 = arith.constant 0 : index
    %c0_18 = arith.constant 0 : index
    %29 = vector.load %arg2[%c1_16, %c0_17, %c0_18] : memref<4x32x32xf32, #tpu.memory_space<vmem>>, vector<1x32x32xf32>
    %30 = vector.shape_cast %29 : vector<1x32x32xf32> to vector<32x32xf32>
    %cst_19 = arith.constant dense<0.000000e+00> : vector<2x32xf32>
    %31 = tpu.matmul %28, %30, %cst_19 {dimension_numbers = #tpu.dot_dimension_numbers<[1], [0], [0], [1], [0, 0, 1, 1], [], []>} : vector<2x32xf32>, vector<32x32xf32>, vector<2x32xf32> -> vector<2x32xf32>
    %32 = vector.extract_strided_slice %0 {offsets = [1, 0], sizes = [1, 32], strides = [1, 1]} : vector<6x32xf32> to vector<1x32xf32>
    %33 = vector.broadcast %32 : vector<1x32xf32> to vector<2x32xf32>
    %34 = arith.addf %31, %33 : vector<2x32xf32>
    %cst_20 = arith.constant 0.000000e+00 : f32
    %35 = vector.broadcast %cst_20 : f32 to vector<2x32xf32>
    %36 = arith.maximumf %34, %35 : vector<2x32xf32>
    %c4 = arith.constant 4 : index
    %37 = arith.index_cast %2 : i32 to index
    %c0_21 = arith.constant 0 : index
    %38 = vector.load %arg1[%c4, %37, %c0_21] : memref<8x16x32xf32, #tpu.memory_space<vmem>>, vector<1x1x32xf32>
    %39 = vector.shape_cast %38 : vector<1x1x32xf32> to vector<1x32xf32>
    %c5 = arith.constant 5 : index
    %40 = arith.index_cast %4 : i32 to index
    %c0_22 = arith.constant 0 : index
    %41 = vector.load %arg1[%c5, %40, %c0_22] : memref<8x16x32xf32, #tpu.memory_space<vmem>>, vector<1x1x32xf32>
    %42 = vector.shape_cast %41 : vector<1x1x32xf32> to vector<1x32xf32>
    %43 = tpu.concatenate %39, %42 in 0 : vector<1x32xf32>, vector<1x32xf32> -> vector<2x32xf32>
    %44 = arith.addf %36, %43 : vector<2x32xf32>
    %c2_23 = arith.constant 2 : index
    %c0_24 = arith.constant 0 : index
    %c0_25 = arith.constant 0 : index
    %45 = vector.load %arg2[%c2_23, %c0_24, %c0_25] : memref<4x32x32xf32, #tpu.memory_space<vmem>>, vector<1x32x32xf32>
    %46 = vector.shape_cast %45 : vector<1x32x32xf32> to vector<32x32xf32>
    %cst_26 = arith.constant dense<0.000000e+00> : vector<2x32xf32>
    %47 = tpu.matmul %44, %46, %cst_26 {dimension_numbers = #tpu.dot_dimension_numbers<[1], [0], [0], [1], [0, 0, 1, 1], [], []>} : vector<2x32xf32>, vector<32x32xf32>, vector<2x32xf32> -> vector<2x32xf32>
    %48 = vector.extract_strided_slice %0 {offsets = [2, 0], sizes = [1, 32], strides = [1, 1]} : vector<6x32xf32> to vector<1x32xf32>
    %49 = vector.broadcast %48 : vector<1x32xf32> to vector<2x32xf32>
    %50 = arith.addf %47, %49 : vector<2x32xf32>
    %cst_27 = arith.constant 0.000000e+00 : f32
    %51 = vector.broadcast %cst_27 : f32 to vector<2x32xf32>
    %52 = arith.maximumf %50, %51 : vector<2x32xf32>
    %c6 = arith.constant 6 : index
    %53 = arith.index_cast %2 : i32 to index
    %c0_28 = arith.constant 0 : index
    %54 = vector.load %arg1[%c6, %53, %c0_28] : memref<8x16x32xf32, #tpu.memory_space<vmem>>, vector<1x1x32xf32>
    %55 = vector.shape_cast %54 : vector<1x1x32xf32> to vector<1x32xf32>
    %c7 = arith.constant 7 : index
    %56 = arith.index_cast %4 : i32 to index
    %c0_29 = arith.constant 0 : index
    %57 = vector.load %arg1[%c7, %56, %c0_29] : memref<8x16x32xf32, #tpu.memory_space<vmem>>, vector<1x1x32xf32>
    %58 = vector.shape_cast %57 : vector<1x1x32xf32> to vector<1x32xf32>
    %59 = tpu.concatenate %55, %58 in 0 : vector<1x32xf32>, vector<1x32xf32> -> vector<2x32xf32>
    %60 = arith.addf %52, %59 : vector<2x32xf32>
    %c0_30 = arith.constant 0 : index
    %c0_31 = arith.constant 0 : index
    %61 = vector.load %arg4[%c0_30, %c0_31] : memref<32x3xf32, #tpu.memory_space<vmem>>, vector<32x3xf32>
    %cst_32 = arith.constant dense<0.000000e+00> : vector<2x3xf32>
    %62 = tpu.matmul %60, %61, %cst_32 {dimension_numbers = #tpu.dot_dimension_numbers<[1], [0], [0], [1], [0, 0, 1, 1], [], []>} : vector<2x32xf32>, vector<32x3xf32>, vector<2x3xf32> -> vector<2x3xf32>
    %63 = vector.extract_strided_slice %1 {offsets = [0, 0], sizes = [1, 3], strides = [1, 1]} : vector<1x67xf32> to vector<1x3xf32>
    %64 = vector.broadcast %63 : vector<1x3xf32> to vector<2x3xf32>
    %65 = arith.addf %62, %64 : vector<2x3xf32>
    %cst_33 = arith.constant dense<0xFF800000> : vector<2xf32>
    %66 = vector.multi_reduction <maximumf>, %65, %cst_33 [1] : vector<2x3xf32> to vector<2xf32>
    %67 = vector.shape_cast %66 : vector<2xf32> to vector<2x1xf32>
    %68 = vector.broadcast %67 : vector<2x1xf32> to vector<2x3xf32>
    %69 = arith.subf %65, %68 : vector<2x3xf32>
    %70 = math.exp %69 : vector<2x3xf32>
    %cst_34 = arith.constant dense<0.000000e+00> : vector<2xf32>
    %71 = vector.multi_reduction <add>, %70, %cst_34 [1] : vector<2x3xf32> to vector<2xf32>
    %72 = vector.shape_cast %71 : vector<2xf32> to vector<2x1xf32>
    %73 = vector.broadcast %72 : vector<2x1xf32> to vector<2x3xf32>
    %74 = arith.divf %70, %73 : vector<2x3xf32>
    %75 = tpu.concatenate %65, %74 in 0 : vector<2x3xf32>, vector<2x3xf32> -> vector<4x3xf32>
    %c0_35 = arith.constant 0 : index
    %c0_36 = arith.constant 0 : index
    %76 = vector.load %arg7[%c0_35, %c0_36] : memref<4x3xf32, #tpu.memory_space<vmem>>, vector<4x3xf32>
    tpu.vector_store %arg7[%c0_35, %c0_36], %75 {strides = array<i32>} : memref<4x3xf32, #tpu.memory_space<vmem>>, vector<4x3xf32>,
    %c6_37 = arith.constant 6 : index
    %77 = arith.index_cast %2 : i32 to index
    %c0_38 = arith.constant 0 : index
    %78 = vector.load %arg1[%c6_37, %77, %c0_38] : memref<8x16x32xf32, #tpu.memory_space<vmem>>, vector<1x1x32xf32>
    %79 = vector.shape_cast %78 : vector<1x1x32xf32> to vector<1x32xf32>
    %c6_39 = arith.constant 6 : index
    %80 = arith.index_cast %3 : i32 to index
    %c0_40 = arith.constant 0 : index
    %81 = vector.load %arg1[%c6_39, %80, %c0_40] : memref<8x16x32xf32, #tpu.memory_space<vmem>>, vector<1x1x32xf32>
    %82 = vector.shape_cast %81 : vector<1x1x32xf32> to vector<1x32xf32>
    %c7_41 = arith.constant 7 : index
    %83 = arith.index_cast %4 : i32 to index
    %c0_42 = arith.constant 0 : index
    %84 = vector.load %arg1[%c7_41, %83, %c0_42] : memref<8x16x32xf32, #tpu.memory_space<vmem>>, vector<1x1x32xf32>
    %85 = vector.shape_cast %84 : vector<1x1x32xf32> to vector<1x32xf32>
    %c7_43 = arith.constant 7 : index
    %86 = arith.index_cast %5 : i32 to index
    %c0_44 = arith.constant 0 : index
    %87 = vector.load %arg1[%c7_43, %86, %c0_44] : memref<8x16x32xf32, #tpu.memory_space<vmem>>, vector<1x1x32xf32>
    %88 = vector.shape_cast %87 : vector<1x1x32xf32> to vector<1x32xf32>
    %89 = tpu.concatenate %79, %82, %85, %88 in 0 : vector<1x32xf32>, vector<1x32xf32>, vector<1x32xf32>, vector<1x32xf32> -> vector<4x32xf32>
    %c3_45 = arith.constant 3 : index
    %c0_46 = arith.constant 0 : index
    %c0_47 = arith.constant 0 : index
    %90 = vector.load %arg2[%c3_45, %c0_46, %c0_47] : memref<4x32x32xf32, #tpu.memory_space<vmem>>, vector<1x32x32xf32>
    %91 = vector.shape_cast %90 : vector<1x32x32xf32> to vector<32x32xf32>
    %cst_48 = arith.constant dense<0.000000e+00> : vector<4x32xf32>
    %92 = tpu.matmul %89, %91, %cst_48 {dimension_numbers = #tpu.dot_dimension_numbers<[1], [0], [0], [1], [0, 0, 1, 1], [], []>} : vector<4x32xf32>, vector<32x32xf32>, vector<4x32xf32> -> vector<4x32xf32>
    %93 = vector.extract_strided_slice %0 {offsets = [3, 0], sizes = [1, 32], strides = [1, 1]} : vector<6x32xf32> to vector<1x32xf32>
    %94 = vector.broadcast %93 : vector<1x32xf32> to vector<4x32xf32>
    %95 = arith.addf %92, %94 : vector<4x32xf32>
    %cst_49 = arith.constant 5.000000e-01 : f32
    %96 = vector.broadcast %cst_49 : f32 to vector<4x32xf32>
    %97 = arith.mulf %96, %95 : vector<4x32xf32>
    %cst_50 = arith.constant 4.471500e-02 : f32
    %98 = vector.broadcast %cst_50 : f32 to vector<4x32xf32>
    %99 = arith.mulf %98, %95 : vector<4x32xf32>
    %100 = arith.mulf %99, %95 : vector<4x32xf32>
    %101 = arith.mulf %100, %95 : vector<4x32xf32>
    %102 = arith.addf %95, %101 : vector<4x32xf32>
    %cst_51 = arith.constant 0.797884583 : f32
    %103 = vector.broadcast %cst_51 : f32 to vector<4x32xf32>
    %104 = arith.mulf %103, %102 : vector<4x32xf32>
    %105 = math.tanh %104 : vector<4x32xf32>
    %cst_52 = arith.constant 1.000000e+00 : f32
    %106 = vector.broadcast %cst_52 : f32 to vector<4x32xf32>
    %107 = arith.addf %106, %105 : vector<4x32xf32>
    %108 = arith.mulf %97, %107 : vector<4x32xf32>
    %cst_53 = arith.constant dense<0.000000e+00> : vector<4xf32>
    %109 = vector.multi_reduction <add>, %108, %cst_53 [1] : vector<4x32xf32> to vector<4xf32>
    %110 = vector.shape_cast %109 : vector<4xf32> to vector<4x1xf32>
    %cst_54 = arith.constant 3.200000e+01 : f32
    %111 = vector.broadcast %cst_54 : f32 to vector<4x1xf32>
    %112 = arith.divf %110, %111 : vector<4x1xf32>
    %113 = vector.broadcast %112 : vector<4x1xf32> to vector<4x32xf32>
    %114 = arith.subf %108, %113 : vector<4x32xf32>
    %115 = vector.broadcast %112 : vector<4x1xf32> to vector<4x32xf32>
    %116 = arith.subf %108, %115 : vector<4x32xf32>
    %117 = arith.mulf %114, %116 : vector<4x32xf32>
    %cst_55 = arith.constant dense<0.000000e+00> : vector<4xf32>
    %118 = vector.multi_reduction <add>, %117, %cst_55 [1] : vector<4x32xf32> to vector<4xf32>
    %119 = vector.shape_cast %118 : vector<4xf32> to vector<4x1xf32>
    %cst_56 = arith.constant 3.200000e+01 : f32
    %120 = vector.broadcast %cst_56 : f32 to vector<4x1xf32>
    %121 = arith.divf %119, %120 : vector<4x1xf32>
    %122 = vector.broadcast %112 : vector<4x1xf32> to vector<4x32xf32>
    %123 = arith.subf %108, %122 : vector<4x32xf32>
    %cst_57 = arith.constant 9.99999996E-13 : f32
    %124 = vector.broadcast %cst_57 : f32 to vector<4x1xf32>
    %125 = arith.addf %121, %124 : vector<4x1xf32>
    %126 = math.rsqrt %125 : vector<4x1xf32>
    %127 = vector.broadcast %126 : vector<4x1xf32> to vector<4x32xf32>
    %128 = arith.mulf %123, %127 : vector<4x32xf32>
    %129 = vector.extract_strided_slice %0 {offsets = [4, 0], sizes = [1, 32], strides = [1, 1]} : vector<6x32xf32> to vector<1x32xf32>
    %130 = vector.broadcast %129 : vector<1x32xf32> to vector<4x32xf32>
    %131 = arith.mulf %128, %130 : vector<4x32xf32>
    %132 = vector.extract_strided_slice %0 {offsets = [5, 0], sizes = [1, 32], strides = [1, 1]} : vector<6x32xf32> to vector<1x32xf32>
    %133 = vector.broadcast %132 : vector<1x32xf32> to vector<4x32xf32>
    %134 = arith.addf %131, %133 : vector<4x32xf32>
    %c0_58 = arith.constant 0 : index
    %c0_59 = arith.constant 0 : index
    %135 = vector.load %arg5[%c0_58, %c0_59] : memref<32x64xf32, #tpu.memory_space<vmem>>, vector<32x64xf32>
    %cst_60 = arith.constant dense<0.000000e+00> : vector<4x64xf32>
    %136 = tpu.matmul %134, %135, %cst_60 {dimension_numbers = #tpu.dot_dimension_numbers<[1], [0], [0], [1], [0, 0, 1, 1], [], []>} : vector<4x32xf32>, vector<32x64xf32>, vector<4x64xf32> -> vector<4x64xf32>
    %137 = vector.extract_strided_slice %1 {offsets = [0, 3], sizes = [1, 64], strides = [1, 1]} : vector<1x67xf32> to vector<1x64xf32>
    %138 = vector.broadcast %137 : vector<1x64xf32> to vector<4x64xf32>
    %139 = arith.addf %136, %138 : vector<4x64xf32>
    %c0_61 = arith.constant 0 : index
    %c0_62 = arith.constant 0 : index
    %140 = vector.load %arg8[%c0_61, %c0_62] : memref<4x64xf32, #tpu.memory_space<vmem>>, vector<4x64xf32>
    tpu.vector_store %arg8[%c0_61, %c0_62], %139 {strides = array<i32>} : memref<4x64xf32, #tpu.memory_space<vmem>>, vector<4x64xf32>,
    return
  }
}

</mosaic_0001>

<llo_original>
// kernel: tpu_custom_call.1
$region0: #{tpu_custom_call.1}
  #allocation0 [shape = 'u32[]', space=smem, size = 0x4, offset = 0x4, fixed_abs, tag = 'smem constant byte address 0x4 - core index']
  #allocation1 [shape = 'u32[72,128]{1,0:T(1,128)}', space=vmem, size = 0x9000, scoped, tag = 'internal scratch']
  %s0 = inlined_call_operand.hbm [shape: s32[4], index: 0, kind: input, shape index: {}]
  %s1 = inlined_call_operand.hbm [shape: f32[8,16,32], index: 1, kind: input, shape index: {}]
  %s2 = inlined_call_operand.hbm [shape: f32[4,32,32], index: 2, kind: input, shape index: {}]
  %s3 = inlined_call_operand.vmem [shape: f32[6,32], index: 3, kind: input, shape index: {}]
  %s4 = inlined_call_operand.vmem [shape: f32[32,3], index: 4, kind: input, shape index: {}]
  %s5 = inlined_call_operand.vmem [shape: f32[32,64], index: 5, kind: input, shape index: {}]
  %s6 = inlined_call_operand.vmem [shape: f32[1,67], index: 6, kind: input, shape index: {}]
  %s7 = inlined_call_operand.hbm [shape: f32[4,3], index: 7, kind: output, shape index: {0}]
  %s8 = inlined_call_operand.hbm [shape: f32[4,64], index: 8, kind: output, shape index: {1}]
  %9 = xla_tuple %s7, %s8
  %s10 = sld [smem:[#allocation0]]
  $region58: #{tpu_custom_call.1} parent=0
    _
  %s12 = ssub.s32 1, %s10
  %s13 = scalar_select 0, %s12, %s10
  $region1: #{tpu_custom_call.1} parent=0
    #allocation2 [shape = 'u8[512]{0}', space=smem, size = 0x200, scoped, tag = 'input window, operand 0, single buffered']
    #allocation3 [shape = 's32[1]{0}', space=sflag, size = 0x4, scoped, tag = 'scoped memory for tpu_custom_call.1']
    #allocation4 [shape = 's32[1]{0}', space=sflag, size = 0x4, scoped, tag = 'scoped memory for tpu_custom_call.1']
    #allocation5 [shape = 's32[1]{0}', space=sflag, size = 0x4, scoped, tag = 'scoped memory for tpu_custom_call.1']
    #allocation6 [shape = 'u8[65536]{0}', space=vmem, size = 0x10000, scoped, tag = 'input window, operand 1, single buffered']
    #allocation7 [shape = 'u8[65536]{0}', space=vmem, size = 0x10000, scoped, tag = 'input window, operand 2, single buffered']
    #allocation8 [shape = 's32[1]{0}', space=sflag, size = 0x4, scoped, tag = 'scoped memory for tpu_custom_call.1']
    #allocation9 [shape = 'u8[2048]{0}', space=vmem, size = 0x800, scoped, tag = 'output window, operand 0, single buffered']
    #allocation10 [shape = 'u8[2048]{0}', space=vmem, size = 0x800, scoped, tag = 'output window, operand 1, single buffered']
    #allocation11 [shape = 's32[1]{0}', space=sflag, size = 0x4, scoped, tag = 'scoped memory for tpu_custom_call.1']
    %14 = vsyncpa [#allocation5], 0
    %15 = vsyncpa [#allocation3], 0
    %16 = vsyncpa [#allocation8], 0
    %17 = vsyncpa [#allocation4], 0
    %18 = vsyncpa [#allocation11], 0
    // Predicated region
    $region2: #{tpu_custom_call.1} parent=1 // pred_check
      _
    $region3: #{tpu_custom_call.1} parent=1 // pred_check_branch
      %20 = sbr.rel (0) target = $region5
    $region4: #{tpu_custom_call.1} parent=1 // pred_region
      %22 = vsyncadd [#allocation5], 0
      %s24 = sshll.u32 %s0, 4
      %s25 = int_to_ptr.hbm [resolvable:$true] %s24
      %27 = dma.hbm_to_smem %s25, 16, [#allocation2], [#allocation5]
    $region5: #{tpu_custom_call.1} parent=1 // pred_fallthru
      _
    // Predicated region
    $region6: #{tpu_custom_call.1} parent=1 // pred_check
      _
    $region7: #{tpu_custom_call.1} parent=1 // pred_check_branch
      %29 = sbr.rel (0) target = $region9
    $region8: #{tpu_custom_call.1} parent=1 // pred_region
      %31 = vsyncadd [#allocation3], 0
      %s32 = sshll.u32 %s1, 4
      %s33 = int_to_ptr.hbm [resolvable:$true] %s32
      %s34 = sshll.u32 [#allocation6], 4
      %s35 = int_to_ptr.vmem [resolvable:$true] %s34
      %40 = dma.hbm_to_vmem [thread:$0]  %s33, 2048, %s35, [#allocation3], 128, 128, 8
    $region9: #{tpu_custom_call.1} parent=1 // pred_fallthru
      _
    // Predicated region
    $region10: #{tpu_custom_call.1} parent=1 // pred_check
      _
    $region11: #{tpu_custom_call.1} parent=1 // pred_check_branch
      %42 = sbr.rel (0) target = $region13
    $region12: #{tpu_custom_call.1} parent=1 // pred_region
      %44 = vsyncadd [#allocation8], 0
      %s45 = sshll.u32 %s2, 4
      %s46 = int_to_ptr.hbm [resolvable:$true] %s45
      %s47 = sshll.u32 [#allocation7], 4
      %s48 = int_to_ptr.vmem [resolvable:$true] %s47
      %53 = dma.hbm_to_vmem [thread:$0]  %s46, 2048, %s48, [#allocation8], 128, 128, 8
    $region13: #{tpu_custom_call.1} parent=1 // pred_fallthru
      _
    // Predicated region
    $region14: #{tpu_custom_call.1} parent=1 // pred_check
      _
    $region15: #{tpu_custom_call.1} parent=1 // pred_check_branch
      %55 = sbr.rel (0) target = $region17
    $region16: #{tpu_custom_call.1} parent=1 // pred_region
      _
    $region17: #{tpu_custom_call.1} parent=1 // pred_fallthru
      _
    // Predicated region
    $region18: #{tpu_custom_call.1} parent=1 // pred_check
      _
    $region19: #{tpu_custom_call.1} parent=1 // pred_check_branch
      %57 = sbr.rel (0) target = $region21
    $region20: #{tpu_custom_call.1} parent=1 // pred_region
      _
    $region21: #{tpu_custom_call.1} parent=1 // pred_fallthru
      _
    // Predicated region
    $region22: #{tpu_custom_call.1} parent=1 // pred_check
      _
    $region23: #{tpu_custom_call.1} parent=1 // pred_check_branch
      %59 = sbr.rel (0) target = $region25
    $region24: #{tpu_custom_call.1} parent=1 // pred_region
      _
    $region25: #{tpu_custom_call.1} parent=1 // pred_fallthru
      _
    // Predicated region
    $region26: #{tpu_custom_call.1} parent=1 // pred_check
      _
    $region27: #{tpu_custom_call.1} parent=1 // pred_check_branch
      %61 = sbr.rel (0) target = $region29
    $region28: #{tpu_custom_call.1} parent=1 // pred_region
      _
    $region29: #{tpu_custom_call.1} parent=1 // pred_fallthru
      _
    // Predicated region
    $region30: #{tpu_custom_call.1} parent=1 // pred_check
      _
    $region31: #{tpu_custom_call.1} parent=1 // pred_check_branch
      %63 = sbr.rel (0) target = $region33
    $region32: #{tpu_custom_call.1} parent=1 // pred_region
      %65 = dma.done [#allocation5], 16
    $region33: #{tpu_custom_call.1} parent=1 // pred_fallthru
      _
    // Predicated region
    $region34: #{tpu_custom_call.1} parent=1 // pred_check
      _
    $region35: #{tpu_custom_call.1} parent=1 // pred_check_branch
      %67 = sbr.rel (0) target = $region37
    $region36: #{tpu_custom_call.1} parent=1 // pred_region
      %69 = dma.done [#allocation3], 2048
    $region37: #{tpu_custom_call.1} parent=1 // pred_fallthru
      _
    // Predicated region
    $region38: #{tpu_custom_call.1} parent=1 // pred_check
      _
    $region39: #{tpu_custom_call.1} parent=1 // pred_check_branch
      %71 = sbr.rel (0) target = $region41
    $region40: #{tpu_custom_call.1} parent=1 // pred_region
      %73 = dma.done [#allocation8], 2048
    $region41: #{tpu_custom_call.1} parent=1 // pred_fallthru
      _
    %74 = sfence
    %v75 = vld [vmem:[%s3] sm:$0x3f]
    %v76 = vld [vmem:[%s6] sm:$0x1]
    %s77 = sld [smem:[#allocation2]]
    %s78 = sld [smem:[#allocation2 + $0x1]]
    %s79 = sld [smem:[#allocation2 + $0x2]]
    %s80 = sld [smem:[#allocation2 + $0x3]]
    %s81 = scalar_lea.vmem [#allocation6], %s77
    %v82 = vld [vmem:[%s81] sm:$0x1]
    %s83 = sadd.s32 %s79, 16
    %s84 = scalar_lea.vmem [#allocation6], %s83
    %v85 = vld [vmem:[%s84] sm:$0x1]
    %v87 = vrot.slane %v85, 7
    %vm89 = vcmask 1040384
    %v90 = vsel %vm89, %v82, %v87
    %v91 = vld [vmem:[#allocation7] sm:$0xff]
    %v92 = vld [vmem:[#allocation7 + $0x8] sm:$0xff]
    %v93 = vld [vmem:[#allocation7 + $0x10] sm:$0xff]
    %v94 = vld [vmem:[#allocation7 + $0x18] sm:$0xff]
    %v95 = vperm.slane %v75, 0
    %vm96 = vcmask 261120
    %v98 = vsel %vm96, %v90, 0
    %100 = vmatpush.msra.mxu0 0.0
    %101 = vmatpush.msra.mxu0 0.0
    %102 = vmatpush.msra.mxu0 0.0
    %103 = vmatpush.msra.mxu0 0.0
    %104 = vmatpush.msra.mxu0 0.0
    %105 = vmatpush.msra.mxu0 0.0
    %106 = vmatpush.msra.mxu0 0.0
    %107 = vmatpush.msra.mxu0 0.0
    %108 = vmatpush.msra.mxu0 0.0
    %109 = vmatpush.msra.mxu0 0.0
    %110 = vmatpush.msra.mxu0 0.0
    %111 = vmatpush.msra.mxu0 0.0
    %112 = vmatpush.msra.mxu0 %v94
    %113 = vmatpush.msra.mxu0 %v93
    %114 = vmatpush.msra.mxu0 %v92
    %115 = vmatpush.msra.mxu0 %v91
    %116 = vmatmul.f32.gmra.mxu0 %v98
    %v117 = vpop.f32.mrf.mxu0
    %v118 = vadd.f32 %v95, %v117
    %119 = vdwg.mxu0
    %v120 = vmax.f32 %v118, 0.0
    %s121 = sadd.s32 %s77, 32
    %s122 = scalar_lea.vmem [#allocation6], %s121
    %v123 = vld [vmem:[%s122] sm:$0x1]
    %s124 = sadd.s32 %s79, 48
    %s125 = scalar_lea.vmem [#allocation6], %s124
    %v126 = vld [vmem:[%s125] sm:$0x1]
    %v128 = vrot.slane %v126, 7
    %v130 = vsel %vm89, %v123, %v128
    %v131 = vadd.f32 %v120, %v130
    %s132 = scalar_lea.vmem [#allocation7], 32
    %v133 = vld [vmem:[%s132] sm:$0xff]
    %v134 = vld [vmem:[%s132 + $0x8] sm:$0xff]
    %v135 = vld [vmem:[%s132 + $0x10] sm:$0xff]
    %v136 = vld [vmem:[%s132 + $0x18] sm:$0xff]
    %v137 = vperm.slane %v75, 1
    %v139 = vsel %vm96, %v131, 0
    %141 = vmatpush.msra.mxu0 0.0
    %142 = vmatpush.msra.mxu0 0.0
    %143 = vmatpush.msra.mxu0 0.0
    %144 = vmatpush.msra.mxu0 0.0
    %145 = vmatpush.msra.mxu0 0.0
    %146 = vmatpush.msra.mxu0 0.0
    %147 = vmatpush.msra.mxu0 0.0
    %148 = vmatpush.msra.mxu0 0.0
    %149 = vmatpush.msra.mxu0 0.0
    %150 = vmatpush.msra.mxu0 0.0
    %151 = vmatpush.msra.mxu0 0.0
    %152 = vmatpush.msra.mxu0 0.0
    %153 = vmatpush.msra.mxu0 %v136
    %154 = vmatpush.msra.mxu0 %v135
    %155 = vmatpush.msra.mxu0 %v134
    %156 = vmatpush.msra.mxu0 %v133
    %157 = vmatmul.f32.gmra.mxu0 %v139
    %v158 = vpop.f32.mrf.mxu0
    %v159 = vadd.f32 %v137, %v158
    %160 = vdwg.mxu0
    %v161 = vmax.f32 %v159, 0.0
    %s162 = sadd.s32 %s77, 64
    %s163 = scalar_lea.vmem [#allocation6], %s162
    %v164 = vld [vmem:[%s163] sm:$0x1]
    %s165 = sadd.s32 %s79, 80
    %s166 = scalar_lea.vmem [#allocation6], %s165
    %v167 = vld [vmem:[%s166] sm:$0x1]
    %v169 = vrot.slane %v167, 7
    %v171 = vsel %vm89, %v164, %v169
    %v172 = vadd.f32 %v161, %v171
    %s173 = scalar_lea.vmem [#allocation7], 64
    %v174 = vld [vmem:[%s173] sm:$0xff]
    %v175 = vld [vmem:[%s173 + $0x8] sm:$0xff]
    %v176 = vld [vmem:[%s173 + $0x10] sm:$0xff]
    %v177 = vld [vmem:[%s173 + $0x18] sm:$0xff]
    %v178 = vperm.slane %v75, 2
    %v180 = vsel %vm96, %v172, 0
    %182 = vmatpush.msra.mxu0 0.0
    %183 = vmatpush.msra.mxu0 0.0
    %184 = vmatpush.msra.mxu0 0.0
    %185 = vmatpush.msra.mxu0 0.0
    %186 = vmatpush.msra.mxu0 0.0
    %187 = vmatpush.msra.mxu0 0.0
    %188 = vmatpush.msra.mxu0 0.0
    %189 = vmatpush.msra.mxu0 0.0
    %190 = vmatpush.msra.mxu0 0.0
    %191 = vmatpush.msra.mxu0 0.0
    %192 = vmatpush.msra.mxu0 0.0
    %193 = vmatpush.msra.mxu0 0.0
    %194 = vmatpush.msra.mxu0 %v177
    %195 = vmatpush.msra.mxu0 %v176
    %196 = vmatpush.msra.mxu0 %v175
    %197 = vmatpush.msra.mxu0 %v174
    %198 = vmatmul.f32.gmra.mxu0 %v180
    %v199 = vpop.f32.mrf.mxu0
    %v200 = vadd.f32 %v178, %v199
    %201 = vdwg.mxu0
    %v202 = vmax.f32 %v200, 0.0
    %s203 = sadd.s32 %s77, 96
    %s204 = scalar_lea.vmem [#allocation6], %s203
    %v205 = vld [vmem:[%s204] sm:$0x1]
    %s206 = sadd.s32 %s79, 112
    %s207 = scalar_lea.vmem [#allocation6], %s206
    %v208 = vld [vmem:[%s207] sm:$0x1]
    %v210 = vrot.slane %v208, 7
    %v212 = vsel %vm89, %v205, %v210
    %v213 = vadd.f32 %v202, %v212
    %v214 = vld [vmem:[%s4] sm:$0xff]
    %v215 = vld [vmem:[%s4 + $0x8] sm:$0xff]
    %v216 = vld [vmem:[%s4 + $0x10] sm:$0xff]
    %v217 = vld [vmem:[%s4 + $0x18] sm:$0xff]
    %v219 = vperm.slane %v76, 0
    %v222 = vsel %vm96, %v213, 0
    %224 = vmatpush.msra.mxu0 0.0
    %225 = vmatpush.msra.mxu0 0.0
    %226 = vmatpush.msra.mxu0 0.0
    %227 = vmatpush.msra.mxu0 0.0
    %228 = vmatpush.msra.mxu0 0.0
    %229 = vmatpush.msra.mxu0 0.0
    %230 = vmatpush.msra.mxu0 0.0
    %231 = vmatpush.msra.mxu0 0.0
    %232 = vmatpush.msra.mxu0 0.0
    %233 = vmatpush.msra.mxu0 0.0
    %234 = vmatpush.msra.mxu0 0.0
    %235 = vmatpush.msra.mxu0 0.0
    %236 = vmatpush.msra.mxu0 %v217
    %237 = vmatpush.msra.mxu0 %v216
    %238 = vmatpush.msra.mxu0 %v215
    %239 = vmatpush.msra.mxu0 %v214
    %240 = vmatmul.f32.gmra.mxu0 %v222
    %v241 = vpop.f32.mrf.mxu0
    %v242 = vadd.f32 %v219, %v241
    %243 = vdwg.mxu0
    %vm244 = vcmask 17408
    %v245 = vsel %vm244, %v242, -inf
    %246 = vmax.xlane.f32.xlu0 %v245
    %v247 = vpop.xlane.xlu0 %246
    %v248 = vsub.f32 %v242, %v247
    %v249 = vmul.f32 %v248, 1.442695
    %v250 = vpow.pop %v249
    %v251 = vsel %vm244, %v250, 0.0
    %252 = vadd.xlane.f32.xlu0 %v251
    %v253 = vpop.xlane.xlu0 %252
    %v254 = vrcp.pop %v253
    %v255 = vmul.f32 %v253, %v254
    %v256 = vsub.f32 1.0, %v255
    %v257 = vmul.f32 %v254, %v256
    %v258 = vadd.f32 %v254, %v257
    %vm259 = vweird.f32 %v253
    %vm260 = vweird.f32 %v254
    %vm261 = vmor %vm259, %vm260
    %v262 = vsel %vm261, %v254, %v258
    %v263 = vand.u32 2147483647, %v253
    %vm264 = vcmp.eq.f32.partialorder %v263, 8.507059e+37
    %v265 = vand.u32 %v253, 2147483648
    %v266 = vor.u32 1.1754944e-38, %v265
    %v267 = vsel %vm264, %v266, %v262
    %v268 = vmul.f32 %v250, %v267
    %v270 = vrot.slane %v268, 6
    %vm272 = vcmask 1041408
    %v273 = vsel %vm272, %v242, %v270
    %vm274 = vcmask 19456
    %275 = vst.msk [vmem:[#allocation9] sm:$0xf] %vm274, %v273
    %v276 = vld [vmem:[%s204] sm:$0x1]
    %s277 = sadd.s32 %s78, 96
    %s278 = scalar_lea.vmem [#allocation6], %s277
    %v279 = vld [vmem:[%s278] sm:$0x1]
    %v280 = vld [vmem:[%s207] sm:$0x1]
    %s281 = sadd.s32 %s80, 112
    %s282 = scalar_lea.vmem [#allocation6], %s281
    %v283 = vld [vmem:[%s282] sm:$0x1]
    %v285 = vrot.slane %v279, 7
    %v288 = vrot.slane %v280, 6
    %v291 = vrot.slane %v283, 5
    %v293 = vsel %vm89, %v276, %v285
    %v294 = vsel %vm272, %v293, %v288
    %vm295 = vcmask 1042432
    %v296 = vsel %vm295, %v294, %v291
    %s297 = scalar_lea.vmem [#allocation7], 96
    %v298 = vld [vmem:[%s297] sm:$0xff]
    %v299 = vld [vmem:[%s297 + $0x8] sm:$0xff]
    %v300 = vld [vmem:[%s297 + $0x10] sm:$0xff]
    %v301 = vld [vmem:[%s297 + $0x18] sm:$0xff]
    %v302 = vperm.slane %v75, 3
    %v304 = vsel %vm96, %v296, 0
    %306 = vmatpush.msra.mxu0 0.0
    %307 = vmatpush.msra.mxu0 0.0
    %308 = vmatpush.msra.mxu0 0.0
    %309 = vmatpush.msra.mxu0 0.0
    %310 = vmatpush.msra.mxu0 0.0
    %311 = vmatpush.msra.mxu0 0.0
    %312 = vmatpush.msra.mxu0 0.0
    %313 = vmatpush.msra.mxu0 0.0
    %314 = vmatpush.msra.mxu0 0.0
    %315 = vmatpush.msra.mxu0 0.0
    %316 = vmatpush.msra.mxu0 0.0
    %317 = vmatpush.msra.mxu0 0.0
    %318 = vmatpush.msra.mxu0 %v301
    %319 = vmatpush.msra.mxu0 %v300
    %320 = vmatpush.msra.mxu0 %v299
    %321 = vmatpush.msra.mxu0 %v298
    %322 = vmatmul.f32.gmra.mxu0 %v304
    %v323 = vpop.f32.mrf.mxu0
    %v324 = vadd.f32 %v302, %v323
    %325 = vdwg.mxu0
    %v326 = vmul.f32 %v324, 0.5
    %v327 = vmul.f32 %v324, 0.044715
    %v328 = vmul.f32 %v327, %v324
    %v329 = vmul.f32 %v328, %v324
    %v330 = vadd.f32 %v324, %v329
    %v331 = vmul.f32 %v330, 0.7978846
    %v332 = vtanh.pop %v331
    %v333 = vadd.f32 %v332, 1.0
    %v334 = vmul.f32 %v326, %v333
    %vm335 = vcmask 257024
    %v336 = vsel %vm335, %v334, 0.0
    %337 = vadd.xlane.f32.xlu0 %v336
    %v338 = vpop.xlane.xlu0 %337
    %v339 = vrcp.pop 32.0
    %v340 = vmul.f32 32.0, %v339
    %v341 = vsub.f32 1.0, %v340
    %v342 = vmul.f32 %v339, %v341
    %v343 = vadd.f32 %v339, %v342
    %vm344 = vweird.f32 %v339
    %v345 = vsel %vm344, %v339, %v343
    %v346 = vmul.f32 %v338, %v345
    %v347 = vsub.f32 %v334, %v346
    %v348 = vmul.f32 %v347, %v347
    %v349 = vsel %vm335, %v348, 0.0
    %350 = vadd.xlane.f32.xlu0 %v349
    %v351 = vpop.xlane.xlu0 %350
    %v352 = vmul.f32 %v351, %v345
    %v353 = vadd.f32 %v352, 1e-12
    %v354 = vrsqrt.pop %v353
    %v355 = vmul.f32 %v354, %v353
    %v356 = vmul.f32 %v355, %v354
    %v357 = vmul.f32 0.5, %v356
    %v358 = vsub.f32 1.5, %v357
    %v359 = vmul.f32 %v354, %v358
    %vm360 = vweird.f32 %v353
    %vm361 = vweird.f32 %v354
    %vm362 = vmor %vm360, %vm361
    %v363 = vsel %vm362, %v354, %v359
    %v364 = vmul.f32 %v347, %v363
    %v365 = vperm.slane %v75, 4
    %v366 = vmul.f32 %v364, %v365
    %v367 = vperm.slane %v75, 5
    %v368 = vadd.f32 %v366, %v367
    %v369 = vld [vmem:[%s5] sm:$0xff]
    %v370 = vld [vmem:[%s5 + $0x8] sm:$0xff]
    %v371 = vld [vmem:[%s5 + $0x10] sm:$0xff]
    %v372 = vld [vmem:[%s5 + $0x18] sm:$0xff]
    %373 = vrot.lane.b32.xlu0 %v219, 125
    %v374 = vpop.permute.xlu0 %373
    %v377 = vsel %vm96, %v368, 0
    %379 = vmatpush.msra.mxu0 0.0
    %380 = vmatpush.msra.mxu0 0.0
    %381 = vmatpush.msra.mxu0 0.0
    %382 = vmatpush.msra.mxu0 0.0
    %383 = vmatpush.msra.mxu0 0.0
    %384 = vmatpush.msra.mxu0 0.0
    %385 = vmatpush.msra.mxu0 0.0
    %386 = vmatpush.msra.mxu0 0.0
    %387 = vmatpush.msra.mxu0 0.0
    %388 = vmatpush.msra.mxu0 0.0
    %389 = vmatpush.msra.mxu0 0.0
    %390 = vmatpush.msra.mxu0 0.0
    %391 = vmatpush.msra.mxu0 %v372
    %392 = vmatpush.msra.mxu0 %v371
    %393 = vmatpush.msra.mxu0 %v370
    %394 = vmatpush.msra.mxu0 %v369
    %395 = vmatmul.f32.gmra.mxu0 %v377
    %v396 = vpop.f32.mrf.mxu0
    %v397 = vadd.f32 %v374, %v396
    %398 = vdwg.mxu0
    %vm399 = vcmask 519168
    %400 = vst.msk [vmem:[#allocation10] sm:$0xf] %vm399, %v397
    // Predicated region
    $region42: #{tpu_custom_call.1} parent=1 // pred_check
      _
    $region43: #{tpu_custom_call.1} parent=1 // pred_check_branch
      %402 = sbr.rel (0) target = $region45
    $region44: #{tpu_custom_call.1} parent=1 // pred_region
      %404 = vsyncadd [#allocation4], 0
      %s406 = sshll.u32 [#allocation9], 4
      %s407 = int_to_ptr.vmem [resolvable:$true] %s406
      %s408 = sshll.u32 %s7, 4
      %s409 = int_to_ptr.hbm [resolvable:$true] %s408
      %411 = dma.vmem_to_hbm [thread:$0]  %s407, 64, %s409, [#allocation4]
    $region45: #{tpu_custom_call.1} parent=1 // pred_fallthru
      _
    // Predicated region
    $region46: #{tpu_custom_call.1} parent=1 // pred_check
      _
    $region47: #{tpu_custom_call.1} parent=1 // pred_check_branch
      %413 = sbr.rel (0) target = $region49
    $region48: #{tpu_custom_call.1} parent=1 // pred_region
      %415 = vsyncadd [#allocation11], 0
      %s417 = sshll.u32 [#allocation10], 4
      %s418 = int_to_ptr.vmem [resolvable:$true] %s417
      %s419 = sshll.u32 %s8, 4
      %s420 = int_to_ptr.hbm [resolvable:$true] %s419
      %422 = dma.vmem_to_hbm [thread:$0]  %s418, 64, %s420, [#allocation11]
    $region49: #{tpu_custom_call.1} parent=1 // pred_fallthru
      _
    // Predicated region
    $region50: #{tpu_custom_call.1} parent=1 // pred_check
      _
    $region51: #{tpu_custom_call.1} parent=1 // pred_check_branch
      %424 = sbr.rel (0) target = $region53
    $region52: #{tpu_custom_call.1} parent=1 // pred_region
      %426 = dma.done [#allocation4], 64
    $region53: #{tpu_custom_call.1} parent=1 // pred_fallthru
      _
    // Predicated region
    $region54: #{tpu_custom_call.1} parent=1 // pred_check
      _
    $region55: #{tpu_custom_call.1} parent=1 // pred_check_branch
      %428 = sbr.rel (0) target = $region57
    $region56: #{tpu_custom_call.1} parent=1 // pred_region
      %430 = dma.done [#allocation11], 64
    $region57: #{tpu_custom_call.1} parent=1 // pred_fallthru
      _
    %431 = vsyncpa [#allocation3], 1
    %432 = vsyncpa [#allocation8], 1
    %433 = vsyncpa [#allocation4], 1
    %434 = vsyncpa [#allocation11], 1
    %435 = vsyncpa [#allocation5], 1

</llo_original>
